<compile_context>
chip_gen: v6e
topology: v6e:2x2x1
jax: 0.10.0
libtpu: 0.0.40
codegen_flags: <defaults>
</compile_context>

<pallas_src>
import jax
import jax.numpy as jnp
from jax import lax
from jax.experimental import pallas as pl
from jax.experimental.pallas import tpu as pltpu


def _round_up(x, m):
    return ((x + m - 1) // m) * m


def _vq_argmin_kernel(x_ref, et_ref, e2_ref, idx_ref, rmin_ref, ridx_ref):
    """One (B-tile, E-tile) grid step of the nearest-codebook search.

    x_ref:    (B_t, Dm)   flat inputs for this batch tile (streamed dtype)
    et_ref:   (Dm, E_t)   pre-transposed codebook tile, already scaled by -2
    e2_ref:   (1,  E_t)   precomputed codebook squared norms (f32)
    idx_ref:  (B_t, 1)    int32 argmin output (resident across the E axis)
    rmin_ref: (B_t, E_t)  f32 lane-resident running minimum   (VMEM scratch)
    ridx_ref: (B_t, E_t)  i32 lane-resident running global idx (VMEM scratch)
    """
    j = pl.program_id(1)
    e_t = rmin_ref.shape[1]

    @pl.when(j == 0)
    def _():
        rmin_ref[...] = jnp.full(rmin_ref.shape, jnp.inf, dtype=rmin_ref.dtype)
        ridx_ref[...] = jnp.zeros(ridx_ref.shape, dtype=ridx_ref.dtype)

    # dist = x @ (-2 e)^T + ||e||^2   (||x||^2 dropped: argmin-invariant)
    xe = jnp.dot(x_ref[...], et_ref[...],
                 preferred_element_type=jnp.float32)            # (B_t, E_t) MXU
    dist = xe + e2_ref[...]                                     # (B_t, E_t) VPU

    # Elementwise (VPU-only) running min/argmin update; strict '<' keeps the
    # earliest E tile on exact ties (first-occurrence like torch.argmin).
    col = lax.broadcasted_iota(jnp.int32, dist.shape, 1) + j * e_t
    better = dist < rmin_ref[...]
    ridx_ref[...] = jnp.where(better, col, ridx_ref[...])
    rmin_ref[...] = jnp.where(better, dist, rmin_ref[...])

    @pl.when(j == pl.num_programs(1) - 1)
    def _():
        # Single XLU reduce per B tile.  Tie-break across lanes on the stored
        # GLOBAL index (not lane position) to preserve first-occurrence order.
        rmin = rmin_ref[...]
        ridx = ridx_ref[...]
        m = jnp.min(rmin, axis=1, keepdims=True)                 # (B_t, 1)
        big = jnp.iinfo(jnp.int32).max
        idx_ref[...] = jnp.min(jnp.where(rmin == m, ridx, big),
                               axis=1, keepdims=True)            # (B_t, 1)


def _vmem_need_bytes(b_tile, e_tile, dm, stream_itemsize):
    x_bytes = 2 * b_tile * dm * stream_itemsize          # x tile, double buffered
    cb_bytes = 2 * dm * e_tile * stream_itemsize         # codebook tile, dbl buf
    e2_bytes = 2 * 8 * e_tile * 4                        # e2 tile (sublane-padded)
    scratch = 2 * b_tile * e_tile * 4                    # running min + idx
    out_bytes = 2 * b_tile * 128 * 4                     # tiny idx output, padded
    interm = 4 * b_tile * e_tile * 4                     # xe/dist/iota/mask live set
    return x_bytes + cb_bytes + e2_bytes + scratch + out_bytes + interm


def _pick_e_tile(e_pad, b_tile, dm, stream_itemsize, budget):
    n = e_pad // 128
    cands = sorted((m * 128 for m in range(1, n + 1) if n % m == 0), reverse=True)
    for e_tile in cands:
        if _vmem_need_bytes(b_tile, e_tile, dm, stream_itemsize) <= budget:
            return e_tile
    return 128


def _vmem_budget_bytes():
    """Per-generation scoped-VMEM budget: ~100 MiB on 128 MiB parts (v5e/v6e),
    48 MiB on 64 MiB parts (v7x)."""
    cap = 64 * 1024 * 1024
    try:
        info = pltpu.get_tpu_info()
        cap = int(getattr(info, "vmem_capacity_bytes", cap))
    except Exception:
        pass
    return 48 * 1024 * 1024 if cap <= 64 * 1024 * 1024 else 100 * 1024 * 1024


def vq_supervised_evaluator(inputs_ncdhw, embedding_weight, num_embeddings,
                            embedding_dim, *, matmul_dtype=jnp.bfloat16):
    """inputs_ncdhw: (B, C, D, H, W); embedding_weight: num_embeddings*embedding_dim
    elements.  Returns one-hot encodings (B, num_embeddings) float32."""
    B = inputs_ncdhw.shape[0]
    flat_input = inputs_ncdhw.reshape(B, -1)                     # (B, Dm)
    assert flat_input.shape[1] == embedding_dim
    E, Dm = num_embeddings, embedding_dim

    all_embeds = embedding_weight.reshape(E, Dm).astype(jnp.float32)
    # Hoisted one-time plain-JAX precompute: codebook norms (f32), and the
    # pre-transposed codebook with the -2 folded in, streamed at matmul_dtype.
    e2 = jnp.sum(all_embeds ** 2, axis=1)[None, :]               # (1, E) f32
    emb_t = jnp.transpose(-2.0 * all_embeds).astype(matmul_dtype)  # (Dm, E)
    x = flat_input.astype(matmul_dtype)

    # ---- pad E to a lane multiple; padded columns can never win (inf norm) --
    E_pad = _round_up(E, 128)
    if E_pad != E:
        emb_t = jnp.pad(emb_t, ((0, 0), (0, E_pad - E)))
        e2 = jnp.pad(e2, ((0, 0), (0, E_pad - E)), constant_values=jnp.inf)

    # ---- tile plan ----------------------------------------------------------
    b_tile = min(256, _round_up(B, 8))        # 256 fills the v6e/v7x MXU in M
    b_pad = _round_up(B, b_tile)
    if b_pad != B:
        x = jnp.pad(x, ((0, b_pad - B), (0, 0)))

    stream_itemsize = jnp.dtype(matmul_dtype).itemsize
    budget = _vmem_budget_bytes()
    e_tile = _pick_e_tile(E_pad, b_tile, Dm, stream_itemsize, budget)
    grid = (b_pad // b_tile, E_pad // e_tile)

    idx = pl.pallas_call(
        _vq_argmin_kernel,
        out_shape=jax.ShapeDtypeStruct((b_pad, 1), jnp.int32),
        grid_spec=pltpu.PrefetchScalarGridSpec(
            num_scalar_prefetch=0,
            grid=grid,
            in_specs=[
                pl.BlockSpec((b_tile, Dm), lambda i, j: (i, 0)),
                pl.BlockSpec((Dm, e_tile), lambda i, j: (0, j)),
                pl.BlockSpec((1, e_tile), lambda i, j: (0, j)),
            ],
            out_specs=pl.BlockSpec((b_tile, 1), lambda i, j: (i, 0)),
            scratch_shapes=[
                pltpu.VMEM((b_tile, e_tile), jnp.float32),   # running min
                pltpu.VMEM((b_tile, e_tile), jnp.int32),     # running global idx
            ],
        ),
        compiler_params=pltpu.CompilerParams(
            dimension_semantics=("parallel", "arbitrary"),
            vmem_limit_bytes=int(budget)),
    )(x, emb_t, e2)

    # One-hot is built OUTSIDE the kernel (plain JAX): no resident (b_tile, E)
    # block, no large writeback of mostly-zeros from the kernel.
    idx = idx[:B, 0]
    return jax.nn.one_hot(idx, E, dtype=jnp.float32)


# --------------------------- pure-JAX reference ------------------------------
def _reference_distances(inputs_ncdhw, embedding_weight, num_embeddings,
                         embedding_dim):
    B = inputs_ncdhw.shape[0]
    x = inputs_ncdhw.reshape(B, -1).astype(jnp.float32)
    e = embedding_weight.reshape(num_embeddings, embedding_dim).astype(jnp.float32)
    dist = (jnp.sum(x ** 2, axis=1, keepdims=True)
            + jnp.sum(e ** 2, axis=1)
            - 2.0 * x @ e.T)
    return dist


def _check(encodings, dist, rel_tol):
    B, E = encodings.shape
    ref_idx = jnp.argmin(dist, axis=1)
    got_idx = jnp.argmax(encodings, axis=1)
    rows = jnp.arange(B)
    gap = jnp.abs(dist[rows, got_idx] - dist[rows, ref_idx])
    tol = rel_tol * (jnp.abs(dist[rows, ref_idx]) + 1.0)
    # Either the exact same code, or an (equally-near) code within tolerance of
    # the reference minimum (reduced-precision streaming may flip exact ties).
    assert bool(jnp.all((got_idx == ref_idx) | (gap <= tol))), (
        got_idx, ref_idx, gap, tol)
    assert bool(jnp.all(jnp.sum(encodings, axis=1) == 1.0))
    assert bool(jnp.all((encodings == 0.0) | (encodings == 1.0)))


if __name__ == "__main__":
    key = jax.random.PRNGKey(0)
    k1, k2 = jax.random.split(key)

    # Small shapes consistent with the module: inputs (B, C, D, H, W),
    # embedding_dim = C*D*H*W, num_embeddings = len(labels) * per-label count.
    B, C, D, H, W = 2, 4, 2, 4, 4
    embedding_dim = C * D * H * W           # 128
    num_embeddings = 2 * 128                # len(labels)=2, 128 per label -> 256

    inputs = jax.random.normal(k1, (B, C, D, H, W), dtype=jnp.float32)
    # Deterministic synthetic "embeddings.weight" (no checkpoint load).
    embedding_weight = jax.random.normal(
        k2, (num_embeddings, embedding_dim), dtype=jnp.float32)

    dist_ref = _reference_distances(inputs, embedding_weight,
                                    num_embeddings, embedding_dim)

    # Default (bf16-streamed) path — tie-tolerant check.
    encodings = vq_supervised_evaluator(inputs, embedding_weight,
                                        num_embeddings, embedding_dim)
    encodings = jax.block_until_ready(encodings)
    assert encodings.shape == (B, num_embeddings)
    _check(encodings, dist_ref, rel_tol=2e-2)

    # f32-streamed path — tight check of the kernel's search logic.
    encodings_f32 = vq_supervised_evaluator(inputs, embedding_weight,
                                            num_embeddings, embedding_dim,
                                            matmul_dtype=jnp.float32)
    encodings_f32 = jax.block_until_ready(encodings_f32)
    _check(encodings_f32, dist_ref, rel_tol=1e-4)

    print("KERNEL_OK")
</pallas_src>

<mosaic_0001>
module attributes {stable_mosaic.version = 11 : i64} {
  func.func @_vq_argmin_kernel(%arg0: i32, %arg1: i32, %arg2: memref<8x128xbf16, #tpu.memory_space<vmem>>, %arg3: memref<128x256xbf16, #tpu.memory_space<vmem>>, %arg4: memref<1x256xf32, #tpu.memory_space<vmem>>, %arg5: memref<8x1xi32, #tpu.memory_space<vmem>>, %arg6: memref<8x256xf32, #tpu.memory_space<vmem>>, %arg7: memref<8x256xi32, #tpu.memory_space<vmem>>) attributes {dimension_semantics = [#tpu.dimension_semantics<parallel>, #tpu.dimension_semantics<arbitrary>], iteration_bounds = array<i64: 1, 1>, scalar_prefetch = 0 : i64, scratch_operands = 2 : i64, tpu.core_type = #tpu.core_type<tc>, window_params = [{transform_indices = @transform_0, window_bounds = array<i64: 8, 128>}, {transform_indices = @transform_1, window_bounds = array<i64: 128, 256>}, {transform_indices = @transform_2, window_bounds = array<i64: 1, 256>}, {transform_indices = @transform_3, window_bounds = array<i64: 8, 1>}]} {
    %c0_i32 = arith.constant 0 : i32
    %0 = arith.cmpi eq, %arg1, %c0_i32 : i32
    %1 = arith.extui %0 : i1 to i32
    %c0_i32_0 = arith.constant 0 : i32
    %2 = arith.cmpi ne, %1, %c0_i32_0 : i32
    scf.if %2 {
      %cst_18 = arith.constant 0x7F800000 : f32
      %24 = vector.broadcast %cst_18 : f32 to vector<8x256xf32>
      %c0_19 = arith.constant 0 : index
      %c0_20 = arith.constant 0 : index
      %25 = vector.load %arg6[%c0_19, %c0_20] : memref<8x256xf32, #tpu.memory_space<vmem>>, vector<8x256xf32>
      tpu.vector_store %arg6[%c0_19, %c0_20], %24 {strides = array<i32>} : memref<8x256xf32, #tpu.memory_space<vmem>>, vector<8x256xf32>,
      %c0_i32_21 = arith.constant 0 : i32
      %26 = vector.broadcast %c0_i32_21 : i32 to vector<8x256xi32>
      %c0_22 = arith.constant 0 : index
      %c0_23 = arith.constant 0 : index
      %27 = vector.load %arg7[%c0_22, %c0_23] : memref<8x256xi32, #tpu.memory_space<vmem>>, vector<8x256xi32>
      tpu.vector_store %arg7[%c0_22, %c0_23], %26 {strides = array<i32>} : memref<8x256xi32, #tpu.memory_space<vmem>>, vector<8x256xi32>,
    } else {
    }
    %c0 = arith.constant 0 : index
    %c0_1 = arith.constant 0 : index
    %3 = vector.load %arg2[%c0, %c0_1] : memref<8x128xbf16, #tpu.memory_space<vmem>>, vector<8x128xbf16>
    %c0_2 = arith.constant 0 : index
    %c0_3 = arith.constant 0 : index
    %4 = vector.load %arg3[%c0_2, %c0_3] : memref<128x256xbf16, #tpu.memory_space<vmem>>, vector<128x256xbf16>
    %cst = arith.constant dense<0.000000e+00> : vector<8x256xf32>
    %5 = tpu.matmul %3, %4, %cst {dimension_numbers = #tpu.dot_dimension_numbers<[1], [0], [0], [1], [0, 0, 1, 1], [], []>} : vector<8x128xbf16>, vector<128x256xbf16>, vector<8x256xf32> -> vector<8x256xf32>
    %c0_4 = arith.constant 0 : index
    %c0_5 = arith.constant 0 : index
    %6 = vector.load %arg4[%c0_4, %c0_5] : memref<1x256xf32, #tpu.memory_space<vmem>>, vector<1x256xf32>
    %7 = vector.broadcast %6 : vector<1x256xf32> to vector<8x256xf32>
    %8 = arith.addf %5, %7 : vector<8x256xf32>
    %9 = tpu.iota {dimensions = array<i32: 1>} : vector<8x256xi32>
    %c256_i32 = arith.constant 256 : i32
    %10 = arith.muli %arg1, %c256_i32 : i32
    %11 = vector.broadcast %10 : i32 to vector<8x256xi32>
    %12 = arith.addi %9, %11 : vector<8x256xi32>
    %c0_6 = arith.constant 0 : index
    %c0_7 = arith.constant 0 : index
    %13 = vector.load %arg6[%c0_6, %c0_7] : memref<8x256xf32, #tpu.memory_space<vmem>>, vector<8x256xf32>
    %14 = arith.cmpf olt, %8, %13 : vector<8x256xf32>
    %c0_8 = arith.constant 0 : index
    %c0_9 = arith.constant 0 : index
    %15 = vector.load %arg7[%c0_8, %c0_9] : memref<8x256xi32, #tpu.memory_space<vmem>>, vector<8x256xi32>
    %16 = arith.select %14, %12, %15 : vector<8x256xi1>, vector<8x256xi32>
    %c0_10 = arith.constant 0 : index
    %c0_11 = arith.constant 0 : index
    %17 = vector.load %arg7[%c0_10, %c0_11] : memref<8x256xi32, #tpu.memory_space<vmem>>, vector<8x256xi32>
    tpu.vector_store %arg7[%c0_10, %c0_11], %16 {strides = array<i32>} : memref<8x256xi32, #tpu.memory_space<vmem>>, vector<8x256xi32>,
    %c0_12 = arith.constant 0 : index
    %c0_13 = arith.constant 0 : index
    %18 = vector.load %arg6[%c0_12, %c0_13] : memref<8x256xf32, #tpu.memory_space<vmem>>, vector<8x256xf32>
    %19 = arith.select %14, %8, %18 : vector<8x256xi1>, vector<8x256xf32>
    %c0_14 = arith.constant 0 : index
    %c0_15 = arith.constant 0 : index
    %20 = vector.load %arg6[%c0_14, %c0_15] : memref<8x256xf32, #tpu.memory_space<vmem>>, vector<8x256xf32>
    tpu.vector_store %arg6[%c0_14, %c0_15], %19 {strides = array<i32>} : memref<8x256xf32, #tpu.memory_space<vmem>>, vector<8x256xf32>,
    %c0_i32_16 = arith.constant 0 : i32
    %21 = arith.cmpi eq, %arg1, %c0_i32_16 : i32
    %22 = arith.extui %21 : i1 to i32
    %c0_i32_17 = arith.constant 0 : i32
    %23 = arith.cmpi ne, %22, %c0_i32_17 : i32
    scf.if %23 {
      %c0_18 = arith.constant 0 : index
      %c0_19 = arith.constant 0 : index
      %24 = vector.load %arg6[%c0_18, %c0_19] : memref<8x256xf32, #tpu.memory_space<vmem>>, vector<8x256xf32>
      %c0_20 = arith.constant 0 : index
      %c0_21 = arith.constant 0 : index
      %25 = vector.load %arg7[%c0_20, %c0_21] : memref<8x256xi32, #tpu.memory_space<vmem>>, vector<8x256xi32>
      %cst_22 = arith.constant dense<0x7F800000> : vector<8xf32>
      %26 = vector.multi_reduction <minimumf>, %24, %cst_22 [1] : vector<8x256xf32> to vector<8xf32>
      %27 = vector.shape_cast %26 : vector<8xf32> to vector<8x1xf32>
      %28 = vector.broadcast %27 : vector<8x1xf32> to vector<8x256xf32>
      %29 = arith.cmpf oeq, %24, %28 : vector<8x256xf32>
      %c2147483647_i32 = arith.constant 2147483647 : i32
      %30 = vector.broadcast %c2147483647_i32 : i32 to vector<8x256xi32>
      %31 = arith.select %29, %25, %30 : vector<8x256xi1>, vector<8x256xi32>
      %cst_23 = arith.constant dense<2147483647> : vector<8xi32>
      %32 = vector.multi_reduction <minsi>, %31, %cst_23 [1] : vector<8x256xi32> to vector<8xi32>
      %33 = vector.shape_cast %32 : vector<8xi32> to vector<8x1xi32>
      %c0_24 = arith.constant 0 : index
      %c0_25 = arith.constant 0 : index
      %34 = vector.load %arg5[%c0_24, %c0_25] : memref<8x1xi32, #tpu.memory_space<vmem>>, vector<8x1xi32>
      tpu.vector_store %arg5[%c0_24, %c0_25], %33 {strides = array<i32>} : memref<8x1xi32, #tpu.memory_space<vmem>>, vector<8x1xi32>,
    } else {
    }
    return
  }
  func.func @transform_0(%arg0: i32, %arg1: i32) -> (i32, i32) {
    %c0_i32 = arith.constant 0 : i32
    %c0_i32_0 = arith.constant 0 : i32
    return %arg0, %c0_i32 : i32, i32
  }
  func.func @transform_1(%arg0: i32, %arg1: i32) -> (i32, i32) {
    %c0_i32 = arith.constant 0 : i32
    %c0_i32_0 = arith.constant 0 : i32
    return %c0_i32, %arg1 : i32, i32
  }
  func.func @transform_2(%arg0: i32, %arg1: i32) -> (i32, i32) {
    %c0_i32 = arith.constant 0 : i32
    %c0_i32_0 = arith.constant 0 : i32
    return %c0_i32, %arg1 : i32, i32
  }
  func.func @transform_3(%arg0: i32, %arg1: i32) -> (i32, i32) {
    %c0_i32 = arith.constant 0 : i32
    %c0_i32_0 = arith.constant 0 : i32
    return %arg0, %c0_i32 : i32, i32
  }
}

</mosaic_0001>

<llo_original>
// kernel: tpu_custom_call.1
$region0: #{tpu_custom_call.1}
  #allocation0 [shape = 'u32[]', space=smem, size = 0x4, offset = 0x4, fixed_abs, tag = 'smem constant byte address 0x4 - core index']
  #allocation1 [shape = 'u32[144,128]{1,0:T(1,128)}', space=vmem, size = 0x12000, scoped, tag = 'internal scratch']
  #allocation2 [shape = 'f32[8,256]{1,0:T(8,128)}', space=vmem, size = 0x2000, scoped, tag = 'scratch operand']
  #allocation3 [shape = 's32[8,256]{1,0:T(8,128)}', space=vmem, size = 0x2000, scoped, tag = 'scratch operand']
  %s0 = inlined_call_operand.hbm [shape: bf16[8,128], index: 0, kind: input, shape index: {}]
  %s1 = inlined_call_operand.hbm [shape: bf16[128,256], index: 1, kind: input, shape index: {}]
  %s2 = inlined_call_operand.vmem [shape: f32[1,256], index: 2, kind: input, shape index: {}]
  %s3 = inlined_call_operand.vmem [shape: s32[8,1], index: 3, kind: output, shape index: {}]
  %s4 = sld [smem:[#allocation0]]
  $region38: #{tpu_custom_call.1} parent=0
    _
  %s6 = ssub.s32 1, %s4
  %s7 = scalar_select 0, %s6, %s4
  $region1: #{tpu_custom_call.1} parent=0
    #allocation4 [shape = 'u8[2048]{0}', space=vmem, size = 0x800, scoped, tag = 'input window, operand 0, single buffered']
    #allocation5 [shape = 's32[1]{0}', space=sflag, size = 0x4, scoped, tag = 'scoped memory for tpu_custom_call.1']
    #allocation6 [shape = 'u8[65536]{0}', space=vmem, size = 0x10000, scoped, tag = 'input window, operand 1, single buffered']
    #allocation7 [shape = 's32[1]{0}', space=sflag, size = 0x4, scoped, tag = 'scoped memory for tpu_custom_call.1']
    %8 = vsyncpa [#allocation5], 0
    %9 = vsyncpa [#allocation7], 0
    // Predicated region
    $region2: #{tpu_custom_call.1} parent=1 // pred_check
      _
    $region3: #{tpu_custom_call.1} parent=1 // pred_check_branch
      %11 = sbr.rel (0) target = $region5
    $region4: #{tpu_custom_call.1} parent=1 // pred_region
      %s13 = ssub.s32 64, 64
      %14 = vsyncadd [#allocation5], %s13
      %s16 = sshll.u32 [#allocation4], 4
      %s17 = int_to_ptr.vmem [resolvable:$true] %s16
      %19 = dma.hbm_to_vmem [thread:$0]  %s0, 64, %s17, [#allocation5]
    $region5: #{tpu_custom_call.1} parent=1 // pred_fallthru
      _
    // Predicated region
    $region6: #{tpu_custom_call.1} parent=1 // pred_check
      _
    $region7: #{tpu_custom_call.1} parent=1 // pred_check_branch
      %21 = sbr.rel (0) target = $region9
    $region8: #{tpu_custom_call.1} parent=1 // pred_region
      %s23 = ssub.s32 2048, 2048
      %24 = vsyncadd [#allocation7], %s23
      %s25 = sshll.u32 [#allocation6], 4
      %s26 = int_to_ptr.vmem [resolvable:$true] %s25
      %31 = dma.hbm_to_vmem [thread:$0]  %s1, 2048, %s26, [#allocation7], 128, 128, 8
    $region9: #{tpu_custom_call.1} parent=1 // pred_fallthru
      _
    // Predicated region
    $region10: #{tpu_custom_call.1} parent=1 // pred_check
      _
    $region11: #{tpu_custom_call.1} parent=1 // pred_check_branch
      %33 = sbr.rel (0) target = $region13
    $region12: #{tpu_custom_call.1} parent=1 // pred_region
      _
    $region13: #{tpu_custom_call.1} parent=1 // pred_fallthru
      _
    // Predicated region
    $region14: #{tpu_custom_call.1} parent=1 // pred_check
      _
    $region15: #{tpu_custom_call.1} parent=1 // pred_check_branch
      %35 = sbr.rel (0) target = $region17
    $region16: #{tpu_custom_call.1} parent=1 // pred_region
      %36 = dma.done [#allocation5], 64
    $region17: #{tpu_custom_call.1} parent=1 // pred_fallthru
      _
    // Predicated region
    $region18: #{tpu_custom_call.1} parent=1 // pred_check
      _
    $region19: #{tpu_custom_call.1} parent=1 // pred_check_branch
      %38 = sbr.rel (0) target = $region21
    $region20: #{tpu_custom_call.1} parent=1 // pred_region
      %39 = dma.done [#allocation7], 2048
    $region21: #{tpu_custom_call.1} parent=1 // pred_fallthru
      _
    %p41 = scmp.eq.s32.totalorder 0, 0
    // Predicated region
    $region22: #{tpu_custom_call.1} parent=1 // pred_check
      %p42 = pneg %p41
    $region23: #{tpu_custom_call.1} parent=1 // pred_check_branch
      %44 = sbr.rel (%p42) target = $region25
    $region24: #{tpu_custom_call.1} parent=1 // pred_region
      %45 = vst [vmem:[#allocation2] sm:$0xff] inf
      %46 = vst [vmem:[#allocation2 + $0x8] sm:$0xff] inf
      %47 = vst [vmem:[#allocation3] sm:$0xff] 0
      %48 = vst [vmem:[#allocation3 + $0x8] sm:$0xff] 0
    $region25: #{tpu_custom_call.1} parent=1 // pred_fallthru
      _
    %v49 = vld [vmem:[#allocation4] sm:$0xf]
    %v50 = vld [vmem:[#allocation6] sm:$0xff]
    %v51 = vld [vmem:[#allocation6 + $0x8] sm:$0xff]
    %v52 = vld [vmem:[#allocation6 + $0x10] sm:$0xff]
    %v53 = vld [vmem:[#allocation6 + $0x18] sm:$0xff]
    %v54 = vld [vmem:[#allocation6 + $0x20] sm:$0xff]
    %v55 = vld [vmem:[#allocation6 + $0x28] sm:$0xff]
    %v56 = vld [vmem:[#allocation6 + $0x30] sm:$0xff]
    %v57 = vld [vmem:[#allocation6 + $0x38] sm:$0xff]
    %v58 = vld [vmem:[#allocation6 + $0x40] sm:$0xff]
    %v59 = vld [vmem:[#allocation6 + $0x48] sm:$0xff]
    %v60 = vld [vmem:[#allocation6 + $0x50] sm:$0xff]
    %v61 = vld [vmem:[#allocation6 + $0x58] sm:$0xff]
    %v62 = vld [vmem:[#allocation6 + $0x60] sm:$0xff]
    %v63 = vld [vmem:[#allocation6 + $0x68] sm:$0xff]
    %v64 = vld [vmem:[#allocation6 + $0x70] sm:$0xff]
    %v65 = vld [vmem:[#allocation6 + $0x78] sm:$0xff]
    %v66 = vld [vmem:[%s2] sm:$0x3]
    %v68 = vlaneseq
    %v69 = vshrl.u32 %v68, 7
    %v70 = vsub.s32 0, %v69
    %v71 = vrot.slane %v66, %v70
    %v72 = vlaneseq
    %v73 = vshrl.u32 %v72, 7
    %v74 = vsub.s32 1, %v73
    %v75 = vrot.slane %v66, %v74
    %v94 = vunpack.c.l.b16 %v50
    %v95 = vunpack.c.h.b16 %v50
    %v96 = vunpack.c.l.b16 %v51
    %v97 = vunpack.c.h.b16 %v51
    %v98 = vunpack.c.l.b16 %v52
    %v99 = vunpack.c.h.b16 %v52
    %v100 = vunpack.c.l.b16 %v53
    %v101 = vunpack.c.h.b16 %v53
    %v102 = vunpack.c.l.b16 %v54
    %v103 = vunpack.c.h.b16 %v54
    %v104 = vunpack.c.l.b16 %v55
    %v105 = vunpack.c.h.b16 %v55
    %v106 = vunpack.c.l.b16 %v56
    %v107 = vunpack.c.h.b16 %v56
    %v108 = vunpack.c.l.b16 %v57
    %v109 = vunpack.c.h.b16 %v57
    %v110 = vunpack.c.l.b16 %v58
    %v111 = vunpack.c.h.b16 %v58
    %v112 = vunpack.c.l.b16 %v59
    %v113 = vunpack.c.h.b16 %v59
    %v114 = vunpack.c.l.b16 %v60
    %v115 = vunpack.c.h.b16 %v60
    %v116 = vunpack.c.l.b16 %v61
    %v117 = vunpack.c.h.b16 %v61
    %v118 = vunpack.c.l.b16 %v62
    %v119 = vunpack.c.h.b16 %v62
    %v120 = vunpack.c.l.b16 %v63
    %v121 = vunpack.c.h.b16 %v63
    %v122 = vunpack.c.l.b16 %v64
    %v123 = vunpack.c.h.b16 %v64
    %v124 = vunpack.c.l.b16 %v65
    %v125 = vunpack.c.h.b16 %v65
    %v126 = vpack.c.b16 %v96, %v94
    %v127 = vpack.c.b16 %v97, %v95
    %v128 = vpack.c.b16 %v100, %v98
    %v129 = vpack.c.b16 %v101, %v99
    %v130 = vpack.c.b16 %v104, %v102
    %v131 = vpack.c.b16 %v105, %v103
    %v132 = vpack.c.b16 %v108, %v106
    %v133 = vpack.c.b16 %v109, %v107
    %v134 = vpack.c.b16 %v112, %v110
    %v135 = vpack.c.b16 %v113, %v111
    %v136 = vpack.c.b16 %v116, %v114
    %v137 = vpack.c.b16 %v117, %v115
    %v138 = vpack.c.b16 %v120, %v118
    %v139 = vpack.c.b16 %v121, %v119
    %v140 = vpack.c.b16 %v124, %v122
    %v141 = vpack.c.b16 %v125, %v123
    %158 = vmatprep.subr.bf16.mxu0 %v141
    %159 = vmatpush1.bf16.msra.mxu0 %v140
    %160 = vmatprep.subr.bf16.mxu0 %v139
    %161 = vmatpush1.bf16.msra.mxu0 %v138
    %162 = vmatprep.subr.bf16.mxu0 %v137
    %163 = vmatpush1.bf16.msra.mxu0 %v136
    %164 = vmatprep.subr.bf16.mxu0 %v135
    %165 = vmatpush1.bf16.msra.mxu0 %v134
    %166 = vmatprep.subr.bf16.mxu0 %v133
    %167 = vmatpush1.bf16.msra.mxu0 %v132
    %168 = vmatprep.subr.bf16.mxu0 %v131
    %169 = vmatpush1.bf16.msra.mxu0 %v130
    %170 = vmatprep.subr.bf16.mxu0 %v129
    %171 = vmatpush1.bf16.msra.mxu0 %v128
    %172 = vmatprep.subr.bf16.mxu0 %v127
    %173 = vmatpush1.bf16.msra.mxu0 %v126
    %174 = vmatprep.subr.bf16.mxu0 0
    %175 = vmatpush2.bf16.msra.mxu0 0
    %176 = vmatprep.subr.bf16.mxu0 0
    %177 = vmatpush2.bf16.msra.mxu0 0
    %178 = vmatprep.subr.bf16.mxu0 0
    %179 = vmatpush2.bf16.msra.mxu0 0
    %180 = vmatprep.subr.bf16.mxu0 0
    %181 = vmatpush2.bf16.msra.mxu0 0
    %182 = vmatprep.subr.bf16.mxu0 0
    %183 = vmatpush2.bf16.msra.mxu0 0
    %184 = vmatprep.subr.bf16.mxu0 0
    %185 = vmatpush2.bf16.msra.mxu0 0
    %186 = vmatprep.subr.bf16.mxu0 0
    %187 = vmatpush2.bf16.msra.mxu0 0
    %188 = vmatprep.subr.bf16.mxu0 0
    %189 = vmatpush2.bf16.msra.mxu0 0
    %190 = vmatprep.mubr.bf16.mxu0 0
    %191 = vmatmul.mubr.bf16.gmra.mxu0 %v49
    %v192 = vpop.f32.mrf.mxu0
    %v193 = vadd.f32 %v71, %v192
    %v194 = vpop.f32.mrf.mxu0
    %v195 = vadd.f32 %v75, %v194
    %v196 = vpop.f32.mrf.mxu0
    %v197 = vpop.f32.mrf.mxu0
    %198 = vdwg.mxu0
    %v199 = vlaneseq
    %v200 = vand.u32 %v199, 127
    %v201 = vadd.s32 %v200, 128
    %s202 = smul.u32 0, 256
    %v203 = vstv %s202
    %v204 = vadd.s32 %v200, %v203
    %v205 = vadd.s32 %v201, %v203
    %v206 = vld [vmem:[#allocation2] sm:$0xff]
    %v207 = vld [vmem:[#allocation2 + $0x8] sm:$0xff]
    %vm208 = vcmp.lt.f32.partialorder %v193, %v206
    %vm209 = vcmp.lt.f32.partialorder %v195, %v207
    %v210 = vld [vmem:[#allocation3] sm:$0xff]
    %v211 = vld [vmem:[#allocation3 + $0x8] sm:$0xff]
    %v212 = vsel %vm208, %v204, %v210
    %v213 = vsel %vm209, %v205, %v211
    %214 = vst [vmem:[#allocation3] sm:$0xff] %v212
    %215 = vst [vmem:[#allocation3 + $0x8] sm:$0xff] %v213
    %v216 = vld [vmem:[#allocation2] sm:$0xff]
    %v217 = vld [vmem:[#allocation2 + $0x8] sm:$0xff]
    %v218 = vsel %vm208, %v193, %v216
    %v219 = vsel %vm209, %v195, %v217
    %220 = vst [vmem:[#allocation2] sm:$0xff] %v218
    %221 = vst [vmem:[#allocation2 + $0x8] sm:$0xff] %v219
    // Predicated region
    $region26: #{tpu_custom_call.1} parent=1 // pred_check
      %p222 = pneg %p41
    $region27: #{tpu_custom_call.1} parent=1 // pred_check_branch
      %224 = sbr.rel (%p222) target = $region29
    $region28: #{tpu_custom_call.1} parent=1 // pred_region
      %v225 = vld [vmem:[#allocation2] sm:$0xff]
      %v226 = vld [vmem:[#allocation2 + $0x8] sm:$0xff]
      %v227 = vld [vmem:[#allocation3] sm:$0xff]
      %v228 = vld [vmem:[#allocation3 + $0x8] sm:$0xff]
      %v229 = vmin.f32 %v225, %v226
      %230 = vmin.xlane.f32.xlu0 %v229
      %v231 = vpop.xlane.xlu0 %230
      %vm232 = vcmp.eq.f32.partialorder %v225, %v231
      %vm233 = vcmp.eq.f32.partialorder %v226, %v231
      %v234 = vsel %vm232, %v227, 2147483647
      %v235 = vsel %vm233, %v228, 2147483647
      %vm236 = vcmp.lt.s32.totalorder %v234, %v235
      %v237 = vsel %vm236, %v234, %v235
      %v238 = vand.u32 %v237, 65535
      %v239 = vshra.s32 %v237, 16
      %v240 = vcvt.s32.f32 %v238
      %v241 = vcvt.s32.f32 %v239
      %242 = vmin.xlane.f32.xlu0 %v241
      %v243 = vpop.xlane.xlu0 %242
      %vm244 = vcmp.eq.f32.partialorder %v241, %v243
      %v245 = vsel %vm244, %v240, inf
      %246 = vmin.xlane.f32.xlu0 %v245
      %v247 = vpop.xlane.xlu0 %246
      %v248 = vcvt.f32.s32 %v247
      %v249 = vcvt.f32.s32 %v243
      %v250 = vshll.u32 %v249, 16
      %v251 = vadd.s32 %v250, %v248
      %vm252 = vcmask 7168
      %253 = vst.msk [vmem:[%s3] sm:$0xff] %vm252, %v251
    $region29: #{tpu_custom_call.1} parent=1 // pred_fallthru
      _
    // Predicated region
    $region30: #{tpu_custom_call.1} parent=1 // pred_check
      _
    $region31: #{tpu_custom_call.1} parent=1 // pred_check_branch
      %255 = sbr.rel (0) target = $region33
    $region32: #{tpu_custom_call.1} parent=1 // pred_region
      _
    $region33: #{tpu_custom_call.1} parent=1 // pred_fallthru
      _
    // Predicated region
    $region34: #{tpu_custom_call.1} parent=1 // pred_check
      _
    $region35: #{tpu_custom_call.1} parent=1 // pred_check_branch
      %257 = sbr.rel (0) target = $region37
    $region36: #{tpu_custom_call.1} parent=1 // pred_region
      _
    $region37: #{tpu_custom_call.1} parent=1 // pred_fallthru
      _
    %258 = vsyncpa [#allocation5], 1
    %259 = vsyncpa [#allocation7], 1

</llo_original>
